<compile_context>
chip_gen: v7x
topology: tpu7x:2x2x1
jax: 0.10.0
libtpu: 0.0.40
codegen_flags: <defaults>
</compile_context>

<pallas_src>
import functools

import jax
import jax.numpy as jnp
from jax import lax
from jax.experimental import pallas as pl
from jax.experimental.pallas import tpu as pltpu


def _round_up(n, m):
    return ((n + m - 1) // m) * m


def _classifier_kernel(x_ref, wt_ref, wscale_ref, o_ref, acc_ref, ssq_ref,
                       *, metric, eps):
    """Grid = (B tiles, K tiles).  K is the reduction axis (last, arbitrary)."""
    k = pl.program_id(1)

    @pl.when(k == 0)
    def _init():
        acc_ref[...] = jnp.zeros_like(acc_ref)
        if metric == "cosine":
            ssq_ref[...] = jnp.zeros_like(ssq_ref)

    # Native-dtype operands, f32 accumulation on the MXU.
    x = x_ref[...]
    acc_ref[...] += jnp.dot(x, wt_ref[...], preferred_element_type=jnp.float32)

    if metric == "cosine":
        xf = x.astype(jnp.float32)
        ssq_ref[...] += jnp.sum(xf * xf, axis=-1, keepdims=True)

    @pl.when(k == pl.num_programs(1) - 1)
    def _finalize():
        # wscale already contains 1/tem (and 1/||w_c|| for cosine).
        scale_w = wscale_ref[...]                      # [1, C_pad] f32
        if metric == "cosine":
            # 1/max(||x||, eps) == rsqrt(max(||x||^2, eps^2))
            inv_x = lax.rsqrt(jnp.maximum(ssq_ref[...], eps * eps))  # [tb, 1]
            o_ref[...] = (acc_ref[...] * inv_x * scale_w).astype(o_ref.dtype)
        else:
            o_ref[...] = (acc_ref[...] * scale_w).astype(o_ref.dtype)


def classifier_forward(x, weights, *, metric="cosine", tem=1.0, out_dtype=None):
    """x: [B, D], weights: [C, D] (PyTorch layout) -> logits [B, C]."""
    B, D = x.shape
    C, D2 = weights.shape
    assert D == D2, "feature dims of x and weights must match"
    if metric not in ("cosine", "euclidean"):
        raise ValueError(f"unsupported metric: {metric}")
    if out_dtype is None:
        out_dtype = x.dtype

    eps = 1e-12
    inv_tem = 1.0 / float(tem)

    # Per-class scale vector (tiny, computed once): folds 1/tem and, for
    # cosine, 1/max(||w_c||, eps) so the kernel never re-normalizes weights.
    if metric == "cosine":
        w32 = weights.astype(jnp.float32)
        w_ss = jnp.sum(w32 * w32, axis=-1)
        w_scale = inv_tem * lax.rsqrt(jnp.maximum(w_ss, eps * eps))
    else:
        w_scale = jnp.full((C,), inv_tem, jnp.float32)

    # Hardware-friendly padding: sublane (8) on B, lane (128) on C and D.
    C_pad = _round_up(C, 128)
    D_pad = _round_up(max(D, 1), 128)
    tb = min(256, _round_up(B, 8))           # batch tile (parallel axis)
    B_pad = _round_up(B, tb)
    tk = min(512, D_pad)                     # reduction (K) tile
    D_pad = _round_up(D_pad, tk)

    # One-time transpose outside the kernel -> [D_pad, C_pad]; zero padding is
    # exact (extra K columns contribute 0, extra classes/rows sliced off).
    wt = jnp.zeros((D_pad, C_pad), weights.dtype).at[:D, :C].set(weights.T)
    xp = jnp.zeros((B_pad, D_pad), x.dtype).at[:B, :D].set(x)
    w_scale_p = jnp.zeros((1, C_pad), jnp.float32).at[0, :C].set(w_scale)

    nb = B_pad // tb
    nk = D_pad // tk

    # VMEM budget estimate (double-buffered inputs + output + scratch).
    itm = jnp.dtype(x.dtype).itemsize
    itw = jnp.dtype(weights.dtype).itemsize
    ito = jnp.dtype(out_dtype).itemsize
    vmem_est = (2 * tb * tk * itm + 2 * tk * C_pad * itw + 2 * C_pad * 4
                + 2 * tb * C_pad * ito + tb * C_pad * 4 + tb * 4)
    vmem_limit = min(64 * 1024 * 1024,
                     max(32 * 1024 * 1024, int(vmem_est * 2)))

    kernel = functools.partial(_classifier_kernel, metric=metric, eps=eps)

    out = pl.pallas_call(
        kernel,
        out_shape=jax.ShapeDtypeStruct((B_pad, C_pad), out_dtype),
        grid=(nb, nk),
        in_specs=[
            pl.BlockSpec((tb, tk), lambda i, k: (i, k)),        # x tile
            pl.BlockSpec((tk, C_pad), lambda i, k: (k, 0)),     # w^T tile
            pl.BlockSpec((1, C_pad), lambda i, k: (0, 0)),      # class scales
        ],
        out_specs=pl.BlockSpec((tb, C_pad), lambda i, k: (i, 0)),
        scratch_shapes=[
            pltpu.VMEM((tb, C_pad), jnp.float32),   # f32 accumulator
            pltpu.VMEM((tb, 1), jnp.float32),       # row sum-of-squares
        ],
        compiler_params=pltpu.CompilerParams(
            dimension_semantics=("parallel", "arbitrary"),
            vmem_limit_bytes=vmem_limit,
        ),
        cost_estimate=pl.CostEstimate(
            flops=2 * B_pad * C_pad * D_pad,
            transcendentals=B_pad + C_pad,
            bytes_accessed=(B_pad * D_pad * itm + D_pad * C_pad * itw
                            + B_pad * C_pad * ito),
        ),
    )(xp, wt, w_scale_p)

    return out[:B, :C]


def classifier_forward_ref(x, weights, *, metric="cosine", tem=1.0):
    """Pure-JAX reference (mirrors the PyTorch forward)."""
    w = weights
    f = x
    if metric == "cosine":
        f = x / jnp.maximum(jnp.linalg.norm(x, axis=-1, keepdims=True), 1e-12)
        w = w / jnp.maximum(jnp.linalg.norm(w, axis=-1, keepdims=True), 1e-12)
    return (f @ w.T) / tem


if __name__ == "__main__":
    # Deterministic synthetic parameters / inputs (no checkpoint load).
    key = jax.random.PRNGKey(0)
    k_x, k_w = jax.random.split(key)

    B, input_dim, nclass = 8, 32, 16
    tem = 0.5

    # __init__: weights = scale * randn(nclass, input_dim), scale = D**-0.5
    scale = input_dim ** (-0.5)
    weights = scale * jax.random.normal(k_w, (nclass, input_dim), jnp.float32)
    x = jax.random.normal(k_x, (B, input_dim), jnp.float32)

    ok = True
    for metric in ("cosine", "euclidean"):
        out = classifier_forward(x, weights, metric=metric, tem=tem)
        out = jax.block_until_ready(out)
        ref = classifier_forward_ref(x, weights, metric=metric, tem=tem)
        if not jnp.allclose(out, ref, atol=1e-5, rtol=1e-5):
            ok = False

    if ok:
        print("KERNEL_OK")
    else:
        print("KERNEL_MISMATCH")
</pallas_src>

<mosaic_0001>
module attributes {stable_mosaic.version = 11 : i64} {
  func.func @_classifier_kernel(%arg0: i32, %arg1: i32, %arg2: memref<8x128xf32, #tpu.memory_space<vmem>>, %arg3: memref<128x128xf32, #tpu.memory_space<vmem>>, %arg4: memref<1x128xf32, #tpu.memory_space<vmem>>, %arg5: memref<8x128xf32, #tpu.memory_space<vmem>>, %arg6: memref<8x128xf32, #tpu.memory_space<vmem>>, %arg7: memref<8x1xf32, #tpu.memory_space<vmem>>) attributes {dimension_semantics = [#tpu.dimension_semantics<parallel>, #tpu.dimension_semantics<arbitrary>], iteration_bounds = array<i64: 1, 1>, scalar_prefetch = 0 : i64, scratch_operands = 2 : i64, tpu.core_type = #tpu.core_type<tc>, window_params = [{transform_indices = @transform_0, window_bounds = array<i64: 8, 128>}, {transform_indices = @transform_1, window_bounds = array<i64: 128, 128>}, {pipeline_mode = #tpu.pipeline_mode<synchronous>, transform_indices = @transform_2, window_bounds = array<i64: 1, 128>}, {transform_indices = @transform_3, window_bounds = array<i64: 8, 128>}]} {
    %c0_i32 = arith.constant 0 : i32
    %0 = arith.cmpi eq, %arg1, %c0_i32 : i32
    %1 = arith.extui %0 : i1 to i32
    %c0_i32_0 = arith.constant 0 : i32
    %2 = arith.cmpi ne, %1, %c0_i32_0 : i32
    scf.if %2 {
      %cst_15 = arith.constant 0.000000e+00 : f32
      %18 = vector.broadcast %cst_15 : f32 to vector<8x128xf32>
      %c0_16 = arith.constant 0 : index
      %c0_17 = arith.constant 0 : index
      %19 = vector.load %arg6[%c0_16, %c0_17] : memref<8x128xf32, #tpu.memory_space<vmem>>, vector<8x128xf32>
      tpu.vector_store %arg6[%c0_16, %c0_17], %18 {strides = array<i32>} : memref<8x128xf32, #tpu.memory_space<vmem>>, vector<8x128xf32>,
      %cst_18 = arith.constant 0.000000e+00 : f32
      %20 = vector.broadcast %cst_18 : f32 to vector<8x1xf32>
      %c0_19 = arith.constant 0 : index
      %c0_20 = arith.constant 0 : index
      %21 = vector.load %arg7[%c0_19, %c0_20] : memref<8x1xf32, #tpu.memory_space<vmem>>, vector<8x1xf32>
      tpu.vector_store %arg7[%c0_19, %c0_20], %20 {strides = array<i32>} : memref<8x1xf32, #tpu.memory_space<vmem>>, vector<8x1xf32>,
    } else {
    }
    %c0 = arith.constant 0 : index
    %c0_1 = arith.constant 0 : index
    %3 = vector.load %arg2[%c0, %c0_1] : memref<8x128xf32, #tpu.memory_space<vmem>>, vector<8x128xf32>
    %c0_2 = arith.constant 0 : index
    %c0_3 = arith.constant 0 : index
    %4 = vector.load %arg6[%c0_2, %c0_3] : memref<8x128xf32, #tpu.memory_space<vmem>>, vector<8x128xf32>
    %c0_4 = arith.constant 0 : index
    %c0_5 = arith.constant 0 : index
    %5 = vector.load %arg3[%c0_4, %c0_5] : memref<128x128xf32, #tpu.memory_space<vmem>>, vector<128x128xf32>
    %cst = arith.constant dense<0.000000e+00> : vector<8x128xf32>
    %6 = tpu.matmul %3, %5, %cst {dimension_numbers = #tpu.dot_dimension_numbers<[1], [0], [0], [1], [0, 0, 1, 1], [], []>} : vector<8x128xf32>, vector<128x128xf32>, vector<8x128xf32> -> vector<8x128xf32>
    %7 = arith.addf %4, %6 : vector<8x128xf32>
    %c0_6 = arith.constant 0 : index
    %c0_7 = arith.constant 0 : index
    %8 = vector.load %arg6[%c0_6, %c0_7] : memref<8x128xf32, #tpu.memory_space<vmem>>, vector<8x128xf32>
    tpu.vector_store %arg6[%c0_6, %c0_7], %7 {strides = array<i32>} : memref<8x128xf32, #tpu.memory_space<vmem>>, vector<8x128xf32>,
    %c0_8 = arith.constant 0 : index
    %c0_9 = arith.constant 0 : index
    %9 = vector.load %arg7[%c0_8, %c0_9] : memref<8x1xf32, #tpu.memory_space<vmem>>, vector<8x1xf32>
    %10 = arith.mulf %3, %3 : vector<8x128xf32>
    %cst_10 = arith.constant dense<0.000000e+00> : vector<8xf32>
    %11 = vector.multi_reduction <add>, %10, %cst_10 [1] : vector<8x128xf32> to vector<8xf32>
    %12 = vector.shape_cast %11 : vector<8xf32> to vector<8x1xf32>
    %13 = arith.addf %9, %12 : vector<8x1xf32>
    %c0_11 = arith.constant 0 : index
    %c0_12 = arith.constant 0 : index
    %14 = vector.load %arg7[%c0_11, %c0_12] : memref<8x1xf32, #tpu.memory_space<vmem>>, vector<8x1xf32>
    tpu.vector_store %arg7[%c0_11, %c0_12], %13 {strides = array<i32>} : memref<8x1xf32, #tpu.memory_space<vmem>>, vector<8x1xf32>,
    %c0_i32_13 = arith.constant 0 : i32
    %15 = arith.cmpi eq, %arg1, %c0_i32_13 : i32
    %16 = arith.extui %15 : i1 to i32
    %c0_i32_14 = arith.constant 0 : i32
    %17 = arith.cmpi ne, %16, %c0_i32_14 : i32
    scf.if %17 {
      %c0_15 = arith.constant 0 : index
      %c0_16 = arith.constant 0 : index
      %18 = vector.load %arg4[%c0_15, %c0_16] : memref<1x128xf32, #tpu.memory_space<vmem>>, vector<1x128xf32>
      %c0_17 = arith.constant 0 : index
      %c0_18 = arith.constant 0 : index
      %19 = vector.load %arg7[%c0_17, %c0_18] : memref<8x1xf32, #tpu.memory_space<vmem>>, vector<8x1xf32>
      %cst_19 = arith.constant 1.000000e-24 : f32
      %20 = vector.broadcast %cst_19 : f32 to vector<8x1xf32>
      %21 = arith.maximumf %19, %20 : vector<8x1xf32>
      %22 = math.rsqrt %21 : vector<8x1xf32>
      %c0_20 = arith.constant 0 : index
      %c0_21 = arith.constant 0 : index
      %23 = vector.load %arg6[%c0_20, %c0_21] : memref<8x128xf32, #tpu.memory_space<vmem>>, vector<8x128xf32>
      %24 = vector.broadcast %22 : vector<8x1xf32> to vector<8x128xf32>
      %25 = arith.mulf %23, %24 : vector<8x128xf32>
      %26 = vector.broadcast %18 : vector<1x128xf32> to vector<8x128xf32>
      %27 = arith.mulf %25, %26 : vector<8x128xf32>
      %c0_22 = arith.constant 0 : index
      %c0_23 = arith.constant 0 : index
      %28 = vector.load %arg5[%c0_22, %c0_23] : memref<8x128xf32, #tpu.memory_space<vmem>>, vector<8x128xf32>
      tpu.vector_store %arg5[%c0_22, %c0_23], %27 {strides = array<i32>} : memref<8x128xf32, #tpu.memory_space<vmem>>, vector<8x128xf32>,
    } else {
    }
    return
  }
  func.func @transform_0(%arg0: i32, %arg1: i32) -> (i32, i32) {
    %c0_i32 = arith.constant 0 : i32
    return %arg0, %arg1 : i32, i32
  }
  func.func @transform_1(%arg0: i32, %arg1: i32) -> (i32, i32) {
    %c0_i32 = arith.constant 0 : i32
    %c0_i32_0 = arith.constant 0 : i32
    return %arg1, %c0_i32 : i32, i32
  }
  func.func @transform_2(%arg0: i32, %arg1: i32) -> (i32, i32) {
    %c0_i32 = arith.constant 0 : i32
    %c0_i32_0 = arith.constant 0 : i32
    %c0_i32_1 = arith.constant 0 : i32
    return %c0_i32, %c0_i32_0 : i32, i32
  }
  func.func @transform_3(%arg0: i32, %arg1: i32) -> (i32, i32) {
    %c0_i32 = arith.constant 0 : i32
    %c0_i32_0 = arith.constant 0 : i32
    return %arg0, %c0_i32 : i32, i32
  }
}

</mosaic_0001>

<llo_original>
// kernel: tpu_custom_call.1
$region0: #{tpu_custom_call.1}
  #allocation0 [shape = 'u32[]', space=smem, size = 0x4, offset = 0x4, fixed_abs, tag = 'smem constant byte address 0x4 - core index']
  #allocation1 [shape = 'u32[144,128]{1,0:T(1,128)}', space=vmem, size = 0x12000, scoped, tag = 'internal scratch']
  #allocation2 [shape = 'f32[8,128]{1,0:T(8,128)}', space=vmem, size = 0x1000, scoped, tag = 'scratch operand']
  #allocation3 [shape = 'f32[8,1]{1,0:T(8,128)}', space=vmem, size = 0x1000, scoped, tag = 'scratch operand']
  %s0 = inlined_call_operand.hbm [shape: f32[8,128], index: 0, kind: input, shape index: {}]
  %s1 = inlined_call_operand.hbm [shape: f32[128,128], index: 1, kind: input, shape index: {}]
  %s2 = inlined_call_operand.vmem [shape: f32[1,128], index: 2, kind: input, shape index: {}]
  %s3 = inlined_call_operand.hbm [shape: f32[8,128], index: 3, kind: output, shape index: {}]
  %s4 = sld [smem:[#allocation0]]
  $region38: #{tpu_custom_call.1} parent=0
    _
  %s6 = ssub.s32 1, %s4
  %s7 = scalar_select 0, %s6, %s4
  $region1: #{tpu_custom_call.1} parent=0
    #allocation4 [shape = 'u8[4096]{0}', space=vmem, size = 0x1000, scoped, tag = 'input window, operand 0, single buffered']
    #allocation5 [shape = 's32[1]{0}', space=sflag, size = 0x4, scoped, tag = 'scoped memory for tpu_custom_call.1']
    #allocation6 [shape = 's32[1]{0}', space=sflag, size = 0x4, scoped, tag = 'scoped memory for tpu_custom_call.1']
    #allocation7 [shape = 'u8[65536]{0}', space=vmem, size = 0x10000, scoped, tag = 'input window, operand 1, single buffered']
    #allocation8 [shape = 's32[1]{0}', space=sflag, size = 0x4, scoped, tag = 'scoped memory for tpu_custom_call.1']
    #allocation9 [shape = 'u8[4096]{0}', space=vmem, size = 0x1000, scoped, tag = 'output window, operand 0, single buffered']
    %8 = vsyncpa [#allocation5], 0
    %9 = vsyncpa [#allocation8], 0
    %10 = vsyncpa [#allocation6], 0
    // Predicated region
    $region2: #{tpu_custom_call.1} parent=1 // pred_check
      _
    $region3: #{tpu_custom_call.1} parent=1 // pred_check_branch
      %12 = sbr.rel (0) target = $region5
    $region4: #{tpu_custom_call.1} parent=1 // pred_region
      %s14 = ssub.s32 128, 128
      %15 = vsyncadd [#allocation5], %s14
      %s17 = sshll.u32 [#allocation4], 4
      %s18 = int_to_ptr.vmem [resolvable:$true] %s17
      %20 = dma.hbm_to_vmem [thread:$0]  %s0, 128, %s18, [#allocation5]
    $region5: #{tpu_custom_call.1} parent=1 // pred_fallthru
      _
    // Predicated region
    $region6: #{tpu_custom_call.1} parent=1 // pred_check
      _
    $region7: #{tpu_custom_call.1} parent=1 // pred_check_branch
      %22 = sbr.rel (0) target = $region9
    $region8: #{tpu_custom_call.1} parent=1 // pred_region
      %s24 = ssub.s32 2048, 2048
      %25 = vsyncadd [#allocation8], %s24
      %s26 = sshll.u32 [#allocation7], 4
      %s27 = int_to_ptr.vmem [resolvable:$true] %s26
      %32 = dma.hbm_to_vmem [thread:$0]  %s1, 2048, %s27, [#allocation8], 128, 128, 8
    $region9: #{tpu_custom_call.1} parent=1 // pred_fallthru
      _
    // Predicated region
    $region10: #{tpu_custom_call.1} parent=1 // pred_check
      _
    $region11: #{tpu_custom_call.1} parent=1 // pred_check_branch
      %34 = sbr.rel (0) target = $region13
    $region12: #{tpu_custom_call.1} parent=1 // pred_region
      _
    $region13: #{tpu_custom_call.1} parent=1 // pred_fallthru
      _
    // Predicated region
    $region14: #{tpu_custom_call.1} parent=1 // pred_check
      _
    $region15: #{tpu_custom_call.1} parent=1 // pred_check_branch
      %36 = sbr.rel (0) target = $region17
    $region16: #{tpu_custom_call.1} parent=1 // pred_region
      %37 = dma.done [#allocation5], 128
    $region17: #{tpu_custom_call.1} parent=1 // pred_fallthru
      _
    // Predicated region
    $region18: #{tpu_custom_call.1} parent=1 // pred_check
      _
    $region19: #{tpu_custom_call.1} parent=1 // pred_check_branch
      %39 = sbr.rel (0) target = $region21
    $region20: #{tpu_custom_call.1} parent=1 // pred_region
      %40 = dma.done [#allocation8], 2048
    $region21: #{tpu_custom_call.1} parent=1 // pred_fallthru
      _
    %p41 = scmp.eq.s32.totalorder 0, 0
    // Predicated region
    $region22: #{tpu_custom_call.1} parent=1 // pred_check
      %p42 = pneg %p41
    $region23: #{tpu_custom_call.1} parent=1 // pred_check_branch
      %44 = sbr.rel (%p42) target = $region25
    $region24: #{tpu_custom_call.1} parent=1 // pred_region
      %45 = vst [vmem:[#allocation2] sm:$0xff] 0.0
      %vm46 = vcmask 7168
      %47 = vst.msk [vmem:[#allocation3] sm:$0xff] %vm46, 0.0
    $region25: #{tpu_custom_call.1} parent=1 // pred_fallthru
      _
    %v48 = vld [vmem:[#allocation4] sm:$0xff]
    %v49 = vld [vmem:[#allocation2] sm:$0xff]
    %v50 = vld [vmem:[#allocation7] sm:$0xff]
    %v51 = vld [vmem:[#allocation7 + $0x8] sm:$0xff]
    %v52 = vld [vmem:[#allocation7 + $0x10] sm:$0xff]
    %v53 = vld [vmem:[#allocation7 + $0x18] sm:$0xff]
    %v54 = vld [vmem:[#allocation7 + $0x20] sm:$0xff]
    %v55 = vld [vmem:[#allocation7 + $0x28] sm:$0xff]
    %v56 = vld [vmem:[#allocation7 + $0x30] sm:$0xff]
    %v57 = vld [vmem:[#allocation7 + $0x38] sm:$0xff]
    %v58 = vld [vmem:[#allocation7 + $0x40] sm:$0xff]
    %v59 = vld [vmem:[#allocation7 + $0x48] sm:$0xff]
    %v60 = vld [vmem:[#allocation7 + $0x50] sm:$0xff]
    %v61 = vld [vmem:[#allocation7 + $0x58] sm:$0xff]
    %v62 = vld [vmem:[#allocation7 + $0x60] sm:$0xff]
    %v63 = vld [vmem:[#allocation7 + $0x68] sm:$0xff]
    %v64 = vld [vmem:[#allocation7 + $0x70] sm:$0xff]
    %v65 = vld [vmem:[#allocation7 + $0x78] sm:$0xff]
    %66 = vmatprep.subr.mxu0 0.0
    %67 = vmatpush1.msra.mxu0 %v50
    %68 = vmatprep.subr.mxu0 0.0
    %69 = vmatpush1.msra.mxu0 %v51
    %70 = vmatprep.subr.mxu0 0.0
    %71 = vmatpush1.msra.mxu0 %v52
    %72 = vmatprep.subr.mxu0 0.0
    %73 = vmatpush1.msra.mxu0 %v53
    %74 = vmatprep.subr.mxu0 0.0
    %75 = vmatpush1.msra.mxu0 %v54
    %76 = vmatprep.subr.mxu0 0.0
    %77 = vmatpush1.msra.mxu0 %v55
    %78 = vmatprep.subr.mxu0 0.0
    %79 = vmatpush1.msra.mxu0 %v56
    %80 = vmatprep.subr.mxu0 0.0
    %81 = vmatpush1.msra.mxu0 %v57
    %82 = vmatprep.subr.mxu0 0.0
    %83 = vmatpush1.msra.mxu0 %v58
    %84 = vmatprep.subr.mxu0 0.0
    %85 = vmatpush1.msra.mxu0 %v59
    %86 = vmatprep.subr.mxu0 0.0
    %87 = vmatpush1.msra.mxu0 %v60
    %88 = vmatprep.subr.mxu0 0.0
    %89 = vmatpush1.msra.mxu0 %v61
    %90 = vmatprep.subr.mxu0 0.0
    %91 = vmatpush1.msra.mxu0 %v62
    %92 = vmatprep.subr.mxu0 0.0
    %93 = vmatpush1.msra.mxu0 %v63
    %94 = vmatprep.subr.mxu0 0.0
    %95 = vmatpush1.msra.mxu0 %v64
    %96 = vmatprep.subr.mxu0 0.0
    %97 = vmatpush1.msra.mxu0 %v65
    %98 = vmatprep.subr.mxu0 0.0
    %99 = vmatpush1.msra.mxu0 0.0
    %100 = vmatprep.subr.mxu0 0.0
    %101 = vmatpush1.msra.mxu0 0.0
    %102 = vmatprep.subr.mxu0 0.0
    %103 = vmatpush1.msra.mxu0 0.0
    %104 = vmatprep.subr.mxu0 0.0
    %105 = vmatpush1.msra.mxu0 0.0
    %106 = vmatprep.subr.mxu0 0.0
    %107 = vmatpush1.msra.mxu0 0.0
    %108 = vmatprep.subr.mxu0 0.0
    %109 = vmatpush1.msra.mxu0 0.0
    %110 = vmatprep.subr.mxu0 0.0
    %111 = vmatpush1.msra.mxu0 0.0
    %112 = vmatprep.subr.mxu0 0.0
    %113 = vmatpush1.msra.mxu0 0.0
    %114 = vmatprep.subr.mxu0 0.0
    %115 = vmatpush1.msra.mxu0 0.0
    %116 = vmatprep.subr.mxu0 0.0
    %117 = vmatpush1.msra.mxu0 0.0
    %118 = vmatprep.subr.mxu0 0.0
    %119 = vmatpush1.msra.mxu0 0.0
    %120 = vmatprep.subr.mxu0 0.0
    %121 = vmatpush1.msra.mxu0 0.0
    %122 = vmatprep.subr.mxu0 0.0
    %123 = vmatpush1.msra.mxu0 0.0
    %124 = vmatprep.subr.mxu0 0.0
    %125 = vmatpush1.msra.mxu0 0.0
    %126 = vmatprep.subr.mxu0 0.0
    %127 = vmatpush1.msra.mxu0 0.0
    %128 = vmatprep.subr.mxu0 0.0
    %129 = vmatpush1.msra.mxu0 0.0
    %130 = vmatprep.mubr.f32.mxu0 0.0
    %131 = vmatmul.mubr.f32.gmra.mrb[0].mxu0 %v48
    %v132 = vpop.f32.mrb[0].mxu0
    %v133 = vadd.f32 0.0, %v132
    %v134 = vpop.f32.mrb[0].mxu0
    %135 = vdwg.mxu0
    %v136 = vadd.f32 %v49, %v133
    %137 = vst [vmem:[#allocation2] sm:$0xff] %v136
    %v138 = vld [vmem:[#allocation3] sm:$0xff]
    %v139 = vmul.f32 %v48, %v48
    %140 = vadd.xlane.f32.xlu0 %v139
    %v141 = vpop.xlane.xlu0 %140
    %v142 = vadd.f32 %v138, %v141
    %vm143 = vcmask 7168
    %144 = vst.msk [vmem:[#allocation3] sm:$0xff] %vm143, %v142
    // Predicated region
    $region26: #{tpu_custom_call.1} parent=1 // pred_check
      %p145 = pneg %p41
    $region27: #{tpu_custom_call.1} parent=1 // pred_check_branch
      %147 = sbr.rel (%p145) target = $region29
    $region28: #{tpu_custom_call.1} parent=1 // pred_region
      %v148 = vld [vmem:[%s2] sm:$0x1]
      %v149 = vld [vmem:[#allocation3] sm:$0xff]
      %v150 = vmax.f32 %v149, 1e-24
      %v151 = vrsqrt.pop %v150
      %v152 = vld [vmem:[#allocation2] sm:$0xff]
      %154 = vset.pattern.permute.xlu0 0
      %155 = vperm.xlu0 %154, %v151
      %v156 = vpop.permute.xlu0 %155
      %v158 = vmul.f32 %v152, %v156
      %v160 = vlaneseq
      %v161 = vshrl.u32 %v160, 7
      %v162 = vsub.s32 0, %v161
      %v163 = vrot.slane %v148, %v162
      %v165 = vmul.f32 %v158, %v163
      %166 = vst [vmem:[#allocation9] sm:$0xff] %v165
    $region29: #{tpu_custom_call.1} parent=1 // pred_fallthru
      _
    // Predicated region
    $region30: #{tpu_custom_call.1} parent=1 // pred_check
      _
    $region31: #{tpu_custom_call.1} parent=1 // pred_check_branch
      %168 = sbr.rel (0) target = $region33
    $region32: #{tpu_custom_call.1} parent=1 // pred_region
      %s170 = ssub.s32 128, 128
      %171 = vsyncadd [#allocation6], %s170
      %s173 = sshll.u32 [#allocation9], 4
      %s174 = int_to_ptr.vmem [resolvable:$true] %s173
      %176 = dma.vmem_to_hbm [thread:$0]  %s174, 128, %s3, [#allocation6]
    $region33: #{tpu_custom_call.1} parent=1 // pred_fallthru
      _
    // Predicated region
    $region34: #{tpu_custom_call.1} parent=1 // pred_check
      _
    $region35: #{tpu_custom_call.1} parent=1 // pred_check_branch
      %178 = sbr.rel (0) target = $region37
    $region36: #{tpu_custom_call.1} parent=1 // pred_region
      %179 = dma.done [#allocation6], 128
    $region37: #{tpu_custom_call.1} parent=1 // pred_fallthru
      _
    %180 = vsyncpa [#allocation5], 1
    %181 = vsyncpa [#allocation8], 1
    %182 = vsyncpa [#allocation6], 1

</llo_original>
